<compile_context>
chip_gen: v7x
topology: tpu7x:2x2x1
jax: 0.10.0
libtpu: 0.0.40
codegen_flags: <defaults>
</compile_context>

<pallas_src>
import jax
import jax.numpy as jnp
from jax.experimental import pallas as pl
from jax.experimental.pallas import tpu as pltpu

LANES = 128
# When splitting a medium-sized input just to get >=4 grid steps (two per v7x
# TensorCore), never shrink blocks below this many rows (~512 KiB for f32).
_MIN_SPLIT_ROWS = 1024
# Cap any single block at ~3.5 MiB so in+out double buffers (4x block) fit
# v5e's 16 MiB default scoped VMEM even for user-supplied tile_rows.
_MAX_BLOCK_BYTES = 3 * 1024 * 1024 + 512 * 1024


def _nan_mask_kernel(x_ref, o_ref):
    x = x_ref[...]
    # where(isnan(x), 0, x) — one VPU compare + select per vreg; HBM-bound.
    o_ref[...] = jnp.where(jnp.isnan(x), jnp.zeros_like(x), x)


def _round_up(a: int, b: int) -> int:
    return ((a + b - 1) // b) * b


def nan_mask(x: jax.Array, *, tile_rows: int | None = None) -> jax.Array:
    """Pallas equivalent of torch.where(torch.isnan(x), torch.zeros_like(x), x)."""
    orig_shape = x.shape
    orig_dtype = x.dtype
    itemsize = jnp.dtype(orig_dtype).itemsize
    # Minimum sublane multiple per packing: (8,128) f32, (16,128) bf16/f16,
    # (32,128) int8/fp8.
    sublane = {4: 8, 2: 16, 1: 32}.get(itemsize, 8)

    if tile_rows is None:
        # ~2 MiB blocks: measured ~85% of HBM roofline for tiled f32
        # elementwise, and 4x (in+out double buffers) = 8 MiB fits every chip's
        # scoped-VMEM default without overrides.
        tile_rows = (2 * 1024 * 1024) // (LANES * itemsize)

    flat = x.reshape(-1)
    n = flat.shape[0]

    # Pad only to a sublane-aligned multiple of the lane width, NOT to a
    # multiple of the tile — Pallas masks the ragged final block itself.
    rows = _round_up(pl.cdiv(n, LANES), sublane)
    padded_n = rows * LANES
    pad = padded_n - n
    if pad:
        # Slow path: one small pad copy. Zero padding is NaN-safe.
        flat = jnp.pad(flat, (0, pad))
    slab = flat.reshape(rows, LANES)  # pad == 0: free bitcast reshape.

    # Tile selection:
    #  - never larger than the data,
    #  - keep >=4 grid steps on medium/large inputs so v7x's two TensorCores
    #    each get >=2 steps and the double-buffer pipeline stays full,
    #  - always a multiple of the packed-sublane minimum,
    #  - hard cap per-block bytes for v5e's scoped-VMEM headroom.
    tile = min(int(tile_rows), rows)
    if rows >= 4 * _MIN_SPLIT_ROWS:
        tile = min(tile, _round_up(pl.cdiv(rows, 4), sublane))
    tile_cap = max(sublane, (_MAX_BLOCK_BYTES // (LANES * itemsize)) // sublane * sublane)
    tile = min(tile, tile_cap)
    tile = _round_up(max(tile, sublane), sublane)

    grid = (pl.cdiv(rows, tile),)
    out = pl.pallas_call(
        _nan_mask_kernel,
        out_shape=jax.ShapeDtypeStruct((rows, LANES), orig_dtype),
        grid_spec=pltpu.PrefetchScalarGridSpec(
            num_scalar_prefetch=0,
            grid=grid,
            in_specs=[pl.BlockSpec((tile, LANES), lambda i: (i, 0))],
            out_specs=pl.BlockSpec((tile, LANES), lambda i: (i, 0)),
        ),
        compiler_params=pltpu.CompilerParams(
            dimension_semantics=("parallel",),
        ),
    )(slab)

    if pad:
        return out.reshape(-1)[:n].reshape(orig_shape)
    # Fast path: no slice copy, reshape of contiguous memory is free.
    return out.reshape(orig_shape)


if __name__ == "__main__":
    key = jax.random.PRNGKey(0)
    B, C, H, W = 2, 4, 16, 16
    x = jax.random.normal(key, (B, C, H, W), dtype=jnp.float32)
    # Inject some NaNs deterministically.
    mask_key = jax.random.fold_in(key, 1)
    nan_bits = jax.random.bernoulli(mask_key, p=0.2, shape=(B, C, H, W))
    x = jnp.where(nan_bits, jnp.float32(jnp.nan), x)

    y = jax.block_until_ready(nan_mask(x))

    # Reference check in plain JAX.
    y_ref = jnp.where(jnp.isnan(x), jnp.zeros_like(x), x)
    assert y.shape == x.shape and y.dtype == x.dtype
    assert not bool(jnp.any(jnp.isnan(y)))
    assert bool(jnp.allclose(y, y_ref))

    # Also exercise the ragged / padded path with a non-multiple-of-128 size.
    x2 = jnp.where(
        jax.random.bernoulli(jax.random.fold_in(key, 2), p=0.3, shape=(3, 5, 7)),
        jnp.float32(jnp.nan),
        jax.random.normal(jax.random.fold_in(key, 3), (3, 5, 7), dtype=jnp.float32),
    )
    y2 = jax.block_until_ready(nan_mask(x2))
    assert bool(jnp.allclose(y2, jnp.where(jnp.isnan(x2), jnp.zeros_like(x2), x2)))

    print("KERNEL_OK")
</pallas_src>

<mosaic_0001>
module attributes {stable_mosaic.version = 11 : i64} {
  func.func @_nan_mask_kernel(%arg0: i32, %arg1: memref<16x128xf32, #tpu.memory_space<vmem>>, %arg2: memref<16x128xf32, #tpu.memory_space<vmem>>) attributes {dimension_semantics = [#tpu.dimension_semantics<parallel>], iteration_bounds = array<i64: 1>, scalar_prefetch = 0 : i64, scratch_operands = 0 : i64, tpu.core_type = #tpu.core_type<tc>, window_params = [{transform_indices = @transform_0, window_bounds = array<i64: 16, 128>}, {transform_indices = @transform_1, window_bounds = array<i64: 16, 128>}]} {
    %c0 = arith.constant 0 : index
    %c0_0 = arith.constant 0 : index
    %0 = vector.load %arg1[%c0, %c0_0] : memref<16x128xf32, #tpu.memory_space<vmem>>, vector<16x128xf32>
    %1 = arith.cmpf one, %0, %0 : vector<16x128xf32>
    %cst = arith.constant 0.000000e+00 : f32
    %2 = vector.broadcast %cst : f32 to vector<16x128xf32>
    %3 = arith.select %1, %2, %0 : vector<16x128xi1>, vector<16x128xf32>
    %c0_1 = arith.constant 0 : index
    %c0_2 = arith.constant 0 : index
    %4 = vector.load %arg2[%c0_1, %c0_2] : memref<16x128xf32, #tpu.memory_space<vmem>>, vector<16x128xf32>
    tpu.vector_store %arg2[%c0_1, %c0_2], %3 {strides = array<i32>} : memref<16x128xf32, #tpu.memory_space<vmem>>, vector<16x128xf32>,
    return
  }
  func.func @transform_0(%arg0: i32) -> (i32, i32) {
    %c0_i32 = arith.constant 0 : i32
    %c0_i32_0 = arith.constant 0 : i32
    return %arg0, %c0_i32 : i32, i32
  }
  func.func @transform_1(%arg0: i32) -> (i32, i32) {
    %c0_i32 = arith.constant 0 : i32
    %c0_i32_0 = arith.constant 0 : i32
    return %arg0, %c0_i32 : i32, i32
  }
}

</mosaic_0001>

<llo_original>
// kernel: tpu_custom_call.1
$region0: #{tpu_custom_call.1}
  #allocation0 [shape = 'u32[]', space=smem, size = 0x4, offset = 0x4, fixed_abs, tag = 'smem constant byte address 0x4 - core index']
  #allocation1 [shape = 'u32[144,128]{1,0:T(1,128)}', space=vmem, size = 0x12000, scoped, tag = 'internal scratch']
  %s0 = inlined_call_operand.hbm [shape: f32[16,128], index: 0, kind: input, shape index: {}]
  %s1 = inlined_call_operand.hbm [shape: f32[16,128], index: 1, kind: output, shape index: {}]
  %s2 = sld [smem:[#allocation0]]
  $region18: #{tpu_custom_call.1} parent=0
    _
  %s4 = ssub.s32 1, %s2
  %s5 = scalar_select 0, %s4, %s2
  $region1: #{tpu_custom_call.1} parent=0
    #allocation2 [shape = 'u8[8192]{0}', space=vmem, size = 0x2000, scoped, tag = 'input window, operand 0, single buffered']
    #allocation3 [shape = 's32[1]{0}', space=sflag, size = 0x4, scoped, tag = 'scoped memory for tpu_custom_call.1']
    #allocation4 [shape = 's32[1]{0}', space=sflag, size = 0x4, scoped, tag = 'scoped memory for tpu_custom_call.1']
    #allocation5 [shape = 'u8[8192]{0}', space=vmem, size = 0x2000, scoped, tag = 'output window, operand 0, single buffered']
    %6 = vsyncpa [#allocation3], 0
    %7 = vsyncpa [#allocation4], 0
    // Predicated region
    $region2: #{tpu_custom_call.1} parent=1 // pred_check
      _
    $region3: #{tpu_custom_call.1} parent=1 // pred_check_branch
      %9 = sbr.rel (0) target = $region5
    $region4: #{tpu_custom_call.1} parent=1 // pred_region
      %s11 = ssub.s32 256, 256
      %12 = vsyncadd [#allocation3], %s11
      %s13 = sshll.u32 [#allocation2], 4
      %s14 = int_to_ptr.vmem [resolvable:$true] %s13
      %19 = dma.hbm_to_vmem [thread:$0]  %s0, 256, %s14, [#allocation3], 128, 128, 8
    $region5: #{tpu_custom_call.1} parent=1 // pred_fallthru
      _
    // Predicated region
    $region6: #{tpu_custom_call.1} parent=1 // pred_check
      _
    $region7: #{tpu_custom_call.1} parent=1 // pred_check_branch
      %21 = sbr.rel (0) target = $region9
    $region8: #{tpu_custom_call.1} parent=1 // pred_region
      %22 = dma.done [#allocation3], 256
    $region9: #{tpu_custom_call.1} parent=1 // pred_fallthru
      _
    %v23 = vld [vmem:[#allocation2] sm:$0xff]
    %v24 = vld [vmem:[#allocation2 + $0x8] sm:$0xff]
    %vm25 = vcmp.ne.f32.partialorder %v23, %v23
    %vm26 = vcmp.ne.f32.partialorder %v24, %v24
    %v27 = vsel %vm25, 0.0, %v23
    %v28 = vsel %vm26, 0.0, %v24
    %29 = vst [vmem:[#allocation5] sm:$0xff] %v27
    %30 = vst [vmem:[#allocation5 + $0x8] sm:$0xff] %v28
    // Predicated region
    $region10: #{tpu_custom_call.1} parent=1 // pred_check
      _
    $region11: #{tpu_custom_call.1} parent=1 // pred_check_branch
      %32 = sbr.rel (0) target = $region13
    $region12: #{tpu_custom_call.1} parent=1 // pred_region
      %s34 = ssub.s32 256, 256
      %35 = vsyncadd [#allocation4], %s34
      %s36 = sshll.u32 [#allocation5], 4
      %s37 = int_to_ptr.vmem [resolvable:$true] %s36
      %42 = dma.vmem_to_hbm [thread:$0]  %s37, 256, %s1, [#allocation4], 128, 128, 8
    $region13: #{tpu_custom_call.1} parent=1 // pred_fallthru
      _
    // Predicated region
    $region14: #{tpu_custom_call.1} parent=1 // pred_check
      _
    $region15: #{tpu_custom_call.1} parent=1 // pred_check_branch
      %44 = sbr.rel (0) target = $region17
    $region16: #{tpu_custom_call.1} parent=1 // pred_region
      %45 = dma.done [#allocation4], 256
    $region17: #{tpu_custom_call.1} parent=1 // pred_fallthru
      _
    %46 = vsyncpa [#allocation3], 1
    %47 = vsyncpa [#allocation4], 1

</llo_original>
